<compile_context>
chip_gen: v5e
topology: v5e:2x2
jax: 0.10.0
libtpu: 0.0.40
codegen_flags: <defaults>
</compile_context>

<pallas_src>
import jax
import jax.numpy as jnp
from jax.experimental import pallas as pl
from jax.experimental.pallas import tpu as pltpu


def _round_up(x: int, m: int) -> int:
    return ((x + m - 1) // m) * m


def _make_repr_loss_kernel(alpha, eps, n_rows, seq_len, hidden, tm, needs_mask):
    inv_h = 1.0 / float(hidden)
    inv_r = 1.0 / float(n_rows)
    inv_rs = 1.0 / float(n_rows * seq_len)

    def kernel(pred_ref, tar_ref, w_ref, g_ref, out_ref, acc_ref):
        # pred/tar: (TM, S) f32 row tiles; w: (S, H) bf16 (resident); g: (S, S) f32 Gram
        # out: (1, 1) f32 SMEM; acc: (2,) f32 SMEM scratch = [sum_sq_diff, repr_sum]
        i = pl.program_id(0)

        @pl.when(i == 0)
        def _init():
            acc_ref[0] = jnp.float32(0.0)
            acc_ref[1] = jnp.float32(0.0)

        pred = pred_ref[...]
        tar = tar_ref[...]
        diff = pred - tar                       # f32; padded rows are all-zero

        # ---- base MSE partial: sum of squared diffs (padded rows contribute 0) ----
        sse = jnp.sum(diff * diff)

        # ---- abs path: single bf16 projection d = diff @ W on the MXU, f32 acc ----
        d = jnp.dot(diff.astype(jnp.bfloat16), w_ref[...],
                    preferred_element_type=jnp.float32)                  # (TM, H)
        abs_row = jnp.sum(jnp.abs(d), axis=-1, keepdims=True) * inv_h    # (TM, 1)

        # ---- cosine path via Gram matrix: rp.rt = p G t^T, |rp|^2 = p G p^T, ... ----
        g = g_ref[...]
        p_g = jnp.dot(pred, g, preferred_element_type=jnp.float32)       # (TM, S)
        t_g = jnp.dot(tar, g, preferred_element_type=jnp.float32)        # (TM, S)
        dot_pt = jnp.sum(p_g * tar, axis=-1, keepdims=True)              # (TM, 1)
        p_sq = jnp.maximum(jnp.sum(p_g * pred, axis=-1, keepdims=True), 0.0)
        t_sq = jnp.maximum(jnp.sum(t_g * tar, axis=-1, keepdims=True), 0.0)
        denom = jnp.maximum(jnp.sqrt(p_sq) * jnp.sqrt(t_sq), eps)
        cos = dot_pt * pl.reciprocal(denom, approx=False)                # (TM, 1)

        # ---- reduce this tile's per-row terms to a scalar partial sum ----
        per_row = abs_row + (1.0 - cos)                                  # (TM, 1)
        if needs_mask:
            row_ids = i * tm + jax.lax.broadcasted_iota(jnp.int32, (tm, 1), 0)
            per_row = jnp.where(row_ids < n_rows, per_row, 0.0)
        repr_partial = jnp.sum(per_row)

        acc_ref[0] = acc_ref[0] + sse
        acc_ref[1] = acc_ref[1] + repr_partial

        @pl.when(i == pl.num_programs(0) - 1)
        def _finalize():
            mse = acc_ref[0] * inv_rs
            repr_loss_v = acc_ref[1] * inv_r
            out_ref[0, 0] = (1.0 - alpha) * mse + alpha * repr_loss_v

    return kernel


def repr_loss(inputs, predictions, targets, w_repr, *, alpha=0.5, eps=1e-8,
              block_rows=256):
    """Pallas implementation of ReprLoss.forward.

    inputs:      (B, S_in, F)   -- unused (repr_inp is dead code in the reference)
    predictions: (B, S_pred, F)
    targets:     (B, S_pred, F)
    w_repr:      (S_pred, 512)  -- deterministic stand-in for the Chronos repr model
    """
    del inputs  # repr_inp never feeds the loss in the reference
    B, S_pred, F = predictions.shape
    assert targets.shape == predictions.shape
    S, H = w_repr.shape
    assert S == S_pred

    R = B * F

    # Row layout (R, S) = permute(0,2,1).reshape(-1, S) from the reference, done in the
    # wrapper so the kernel sees lane-dense 2-D tiles and plain 2-D MXU operands.
    # TODO(synk): fusing this relayout into the kernel (contracting over S on the
    # (B,S,F) layout) would save one HBM round-trip per input.
    pred_rows = jnp.transpose(predictions, (0, 2, 1)).reshape(R, S).astype(jnp.float32)
    tar_rows = jnp.transpose(targets, (0, 2, 1)).reshape(R, S).astype(jnp.float32)

    # Row-tile size: multiple of 8 sublanes, capped so tiny problems stay one/few tiles.
    tm = _round_up(min(block_rows, R), 8)
    r_pad = _round_up(R, tm)
    needs_mask = r_pad != R
    if needs_mask:
        pad = r_pad - R
        pred_rows = jnp.pad(pred_rows, ((0, pad), (0, 0)))
        tar_rows = jnp.pad(tar_rows, ((0, pad), (0, 0)))
    steps = r_pad // tm

    w_f32 = w_repr.astype(jnp.float32)
    w_bf16 = w_f32.astype(jnp.bfloat16)      # bf16 projection weights for the MXU
    gram = jnp.dot(w_f32, w_f32.T)           # (S, S) f32 Gram matrix, computed once

    kernel = _make_repr_loss_kernel(float(alpha), float(eps), R, S, H, tm, needs_mask)

    out = pl.pallas_call(
        kernel,
        out_shape=jax.ShapeDtypeStruct((1, 1), jnp.float32),
        grid_spec=pltpu.PrefetchScalarGridSpec(
            num_scalar_prefetch=0,
            grid=(steps,),
            in_specs=[
                pl.BlockSpec((tm, S), lambda i: (i, 0)),   # pred rows tile
                pl.BlockSpec((tm, S), lambda i: (i, 0)),   # tar rows tile
                pl.BlockSpec((S, H), lambda i: (0, 0)),    # W    (resident, bf16)
                pl.BlockSpec((S, S), lambda i: (0, 0)),    # Gram (resident, f32)
            ],
            out_specs=pl.BlockSpec((1, 1), lambda i: (0, 0),
                                   memory_space=pltpu.MemorySpace.SMEM),
            scratch_shapes=[pltpu.SMEM((2,), jnp.float32)],
        ),
        compiler_params=pltpu.CompilerParams(
            dimension_semantics=("arbitrary",),
            vmem_limit_bytes=32 * 1024 * 1024,
        ),
    )(pred_rows, tar_rows, w_bf16, gram)
    return out[0, 0]


def _reference(inputs, predictions, targets, w_repr, alpha=0.5, eps=1e-8):
    """Pure-JAX (f32) reference for verification."""
    del inputs
    B, S_pred, F = predictions.shape
    mse = jnp.mean((predictions - targets) ** 2)
    pr = jnp.transpose(predictions, (0, 2, 1)).reshape(B * F, S_pred) @ w_repr
    tr = jnp.transpose(targets, (0, 2, 1)).reshape(B * F, S_pred) @ w_repr
    abs_loss = jnp.mean(jnp.abs(pr - tr), axis=-1)
    cos = jnp.sum(pr * tr, -1) / jnp.maximum(
        jnp.linalg.norm(pr, axis=-1) * jnp.linalg.norm(tr, axis=-1), eps
    )
    repr_l = jnp.mean(abs_loss + (1.0 - cos))
    return (1.0 - alpha) * mse + alpha * repr_l


if __name__ == "__main__":
    key = jax.random.PRNGKey(0)
    k1, k2, k3, k4 = jax.random.split(key, 4)

    # Small shapes: B=2, F=5 features (R=10 rows -> exercises the masked partial tile),
    # S_pred=8, hidden fixed at 512 by the module.
    B, S_in, S_pred, F, H = 2, 16, 8, 5, 512
    alpha = 0.5

    inputs = jax.random.normal(k1, (B, S_in, F), dtype=jnp.float32)
    predictions = jax.random.normal(k2, (B, S_pred, F), dtype=jnp.float32)
    targets = jax.random.normal(k3, (B, S_pred, F), dtype=jnp.float32)

    # Deterministic synthetic repr-model weights (stand-in for ChronosRepr).
    w_repr = jax.random.normal(k4, (S_pred, H), dtype=jnp.float32) * 0.05

    # block_rows=8 -> 2 grid steps (tests accumulation + padded-row masking).
    out = repr_loss(inputs, predictions, targets, w_repr, alpha=alpha, block_rows=8)
    out = jax.block_until_ready(out)

    ref = _reference(inputs, predictions, targets, w_repr, alpha=alpha)
    # bf16 projection on the abs_loss path -> slightly relaxed tolerance vs f32 ref.
    assert jnp.allclose(out, ref, rtol=5e-3, atol=5e-3), (out, ref)

    print("KERNEL_OK")
</pallas_src>

<mosaic_0001>
module attributes {stable_mosaic.version = 11 : i64} {
  func.func @kernel(%arg0: i32, %arg1: memref<8x8xf32, #tpu.memory_space<vmem>>, %arg2: memref<8x8xf32, #tpu.memory_space<vmem>>, %arg3: memref<8x512xbf16, #tpu.memory_space<vmem>>, %arg4: memref<8x8xf32, #tpu.memory_space<vmem>>, %arg5: memref<1x1xf32, #tpu.memory_space<smem>>, %arg6: memref<2xf32, #tpu.memory_space<smem>>) attributes {dimension_semantics = [#tpu.dimension_semantics<arbitrary>], iteration_bounds = array<i64: 2>, scalar_prefetch = 0 : i64, scratch_operands = 1 : i64, tpu.core_type = #tpu.core_type<tc>, window_params = [{transform_indices = @transform_0, window_bounds = array<i64: 8, 8>}, {transform_indices = @transform_1, window_bounds = array<i64: 8, 8>}, {pipeline_mode = #tpu.pipeline_mode<synchronous>, transform_indices = @transform_2, window_bounds = array<i64: 8, 512>}, {pipeline_mode = #tpu.pipeline_mode<synchronous>, transform_indices = @transform_3, window_bounds = array<i64: 8, 8>}, {transform_indices = @transform_4, window_bounds = array<i64: 1, 1>}]} {
    %c0_i32 = arith.constant 0 : i32
    %0 = arith.cmpi eq, %arg0, %c0_i32 : i32
    %1 = arith.extui %0 : i1 to i32
    %c0_i32_0 = arith.constant 0 : i32
    %2 = arith.cmpi ne, %1, %c0_i32_0 : i32
    scf.if %2 {
      %cst_26 = arith.constant 0.000000e+00 : f32
      %c0_27 = arith.constant 0 : index
      %66 = memref.load %arg6[%c0_27] : memref<2xf32, #tpu.memory_space<smem>>
      memref.store %cst_26, %arg6[%c0_27] : memref<2xf32, #tpu.memory_space<smem>>
      %cst_28 = arith.constant 0.000000e+00 : f32
      %c1_29 = arith.constant 1 : index
      %67 = memref.load %arg6[%c1_29] : memref<2xf32, #tpu.memory_space<smem>>
      memref.store %cst_28, %arg6[%c1_29] : memref<2xf32, #tpu.memory_space<smem>>
    } else {
    }
    %c0 = arith.constant 0 : index
    %c0_1 = arith.constant 0 : index
    %3 = vector.load %arg1[%c0, %c0_1] : memref<8x8xf32, #tpu.memory_space<vmem>>, vector<8x8xf32>
    %c0_2 = arith.constant 0 : index
    %c0_3 = arith.constant 0 : index
    %4 = vector.load %arg2[%c0_2, %c0_3] : memref<8x8xf32, #tpu.memory_space<vmem>>, vector<8x8xf32>
    %5 = arith.subf %3, %4 : vector<8x8xf32>
    %6 = arith.mulf %5, %5 : vector<8x8xf32>
    %7 = vector.shape_cast %6 : vector<8x8xf32> to vector<1x8x8xf32>
    %cst = arith.constant dense<0.000000e+00> : vector<1xf32>
    %8 = vector.multi_reduction <add>, %7, %cst [1, 2] : vector<1x8x8xf32> to vector<1xf32>
    %9 = vector.shape_cast %8 : vector<1xf32> to vector<1x1x1xf32>
    %10 = vector.extract %9[0, 0, 0] : f32 from vector<1x1x1xf32>
    %11 = arith.truncf %5 : vector<8x8xf32> to vector<8x8xbf16>
    %c0_4 = arith.constant 0 : index
    %c0_5 = arith.constant 0 : index
    %12 = vector.load %arg3[%c0_4, %c0_5] : memref<8x512xbf16, #tpu.memory_space<vmem>>, vector<8x512xbf16>
    %cst_6 = arith.constant dense<0.000000e+00> : vector<8x512xf32>
    %13 = tpu.matmul %11, %12, %cst_6 {dimension_numbers = #tpu.dot_dimension_numbers<[1], [0], [0], [1], [0, 0, 1, 1], [], []>} : vector<8x8xbf16>, vector<8x512xbf16>, vector<8x512xf32> -> vector<8x512xf32>
    %14 = math.absf %13 : vector<8x512xf32>
    %cst_7 = arith.constant dense<0.000000e+00> : vector<8xf32>
    %15 = vector.multi_reduction <add>, %14, %cst_7 [1] : vector<8x512xf32> to vector<8xf32>
    %16 = vector.shape_cast %15 : vector<8xf32> to vector<8x1xf32>
    %cst_8 = arith.constant 0.001953125 : f32
    %17 = vector.broadcast %cst_8 : f32 to vector<8x1xf32>
    %18 = arith.mulf %16, %17 : vector<8x1xf32>
    %c0_9 = arith.constant 0 : index
    %c0_10 = arith.constant 0 : index
    %19 = vector.load %arg4[%c0_9, %c0_10] : memref<8x8xf32, #tpu.memory_space<vmem>>, vector<8x8xf32>
    %cst_11 = arith.constant dense<0.000000e+00> : vector<8x8xf32>
    %20 = tpu.matmul %3, %19, %cst_11 {dimension_numbers = #tpu.dot_dimension_numbers<[1], [0], [0], [1], [0, 0, 1, 1], [], []>} : vector<8x8xf32>, vector<8x8xf32>, vector<8x8xf32> -> vector<8x8xf32>
    %cst_12 = arith.constant dense<0.000000e+00> : vector<8x8xf32>
    %21 = tpu.matmul %4, %19, %cst_12 {dimension_numbers = #tpu.dot_dimension_numbers<[1], [0], [0], [1], [0, 0, 1, 1], [], []>} : vector<8x8xf32>, vector<8x8xf32>, vector<8x8xf32> -> vector<8x8xf32>
    %22 = arith.mulf %20, %4 : vector<8x8xf32>
    %cst_13 = arith.constant dense<0.000000e+00> : vector<8xf32>
    %23 = vector.multi_reduction <add>, %22, %cst_13 [1] : vector<8x8xf32> to vector<8xf32>
    %24 = vector.shape_cast %23 : vector<8xf32> to vector<8x1xf32>
    %25 = arith.mulf %20, %3 : vector<8x8xf32>
    %cst_14 = arith.constant dense<0.000000e+00> : vector<8xf32>
    %26 = vector.multi_reduction <add>, %25, %cst_14 [1] : vector<8x8xf32> to vector<8xf32>
    %27 = vector.shape_cast %26 : vector<8xf32> to vector<8x1xf32>
    %cst_15 = arith.constant 0.000000e+00 : f32
    %28 = vector.broadcast %cst_15 : f32 to vector<8x1xf32>
    %29 = arith.maximumf %27, %28 : vector<8x1xf32>
    %30 = arith.mulf %21, %4 : vector<8x8xf32>
    %cst_16 = arith.constant dense<0.000000e+00> : vector<8xf32>
    %31 = vector.multi_reduction <add>, %30, %cst_16 [1] : vector<8x8xf32> to vector<8xf32>
    %32 = vector.shape_cast %31 : vector<8xf32> to vector<8x1xf32>
    %cst_17 = arith.constant 0.000000e+00 : f32
    %33 = vector.broadcast %cst_17 : f32 to vector<8x1xf32>
    %34 = arith.maximumf %32, %33 : vector<8x1xf32>
    %35 = math.sqrt %29 : vector<8x1xf32>
    %36 = math.sqrt %34 : vector<8x1xf32>
    %37 = arith.mulf %35, %36 : vector<8x1xf32>
    %cst_18 = arith.constant 9.99999993E-9 : f32
    %38 = vector.broadcast %cst_18 : f32 to vector<8x1xf32>
    %39 = arith.maximumf %37, %38 : vector<8x1xf32>
    %40 = tpu.reciprocal %39 : vector<8x1xf32> -> vector<8x1xf32>
    %41 = arith.mulf %24, %40 : vector<8x1xf32>
    %cst_19 = arith.constant 1.000000e+00 : f32
    %42 = vector.broadcast %cst_19 : f32 to vector<8x1xf32>
    %43 = arith.subf %42, %41 : vector<8x1xf32>
    %44 = arith.addf %18, %43 : vector<8x1xf32>
    %c8_i32 = arith.constant 8 : i32
    %45 = arith.muli %arg0, %c8_i32 : i32
    %46 = tpu.iota {dimensions = array<i32: 0>} : vector<8x1xi32>
    %47 = vector.broadcast %45 : i32 to vector<8x1xi32>
    %48 = arith.addi %47, %46 : vector<8x1xi32>
    %c10_i32 = arith.constant 10 : i32
    %49 = vector.broadcast %c10_i32 : i32 to vector<8x1xi32>
    %50 = arith.cmpi slt, %48, %49 : vector<8x1xi32>
    %cst_20 = arith.constant 0.000000e+00 : f32
    %51 = vector.broadcast %cst_20 : f32 to vector<8x1xf32>
    %52 = arith.select %50, %44, %51 : vector<8x1xi1>, vector<8x1xf32>
    %53 = vector.shape_cast %52 : vector<8x1xf32> to vector<1x8x1xf32>
    %cst_21 = arith.constant dense<0.000000e+00> : vector<1xf32>
    %54 = vector.multi_reduction <add>, %53, %cst_21 [1, 2] : vector<1x8x1xf32> to vector<1xf32>
    %55 = vector.shape_cast %54 : vector<1xf32> to vector<1x1x1xf32>
    %56 = vector.extract %55[0, 0, 0] : f32 from vector<1x1x1xf32>
    %c0_22 = arith.constant 0 : index
    %57 = memref.load %arg6[%c0_22] : memref<2xf32, #tpu.memory_space<smem>>
    %58 = arith.addf %57, %10 : f32
    %c0_23 = arith.constant 0 : index
    %59 = memref.load %arg6[%c0_23] : memref<2xf32, #tpu.memory_space<smem>>
    memref.store %58, %arg6[%c0_23] : memref<2xf32, #tpu.memory_space<smem>>
    %c1 = arith.constant 1 : index
    %60 = memref.load %arg6[%c1] : memref<2xf32, #tpu.memory_space<smem>>
    %61 = arith.addf %60, %56 : f32
    %c1_24 = arith.constant 1 : index
    %62 = memref.load %arg6[%c1_24] : memref<2xf32, #tpu.memory_space<smem>>
    memref.store %61, %arg6[%c1_24] : memref<2xf32, #tpu.memory_space<smem>>
    %c1_i32 = arith.constant 1 : i32
    %63 = arith.cmpi eq, %arg0, %c1_i32 : i32
    %64 = arith.extui %63 : i1 to i32
    %c0_i32_25 = arith.constant 0 : i32
    %65 = arith.cmpi ne, %64, %c0_i32_25 : i32
    scf.if %65 {
      %c0_26 = arith.constant 0 : index
      %66 = memref.load %arg6[%c0_26] : memref<2xf32, #tpu.memory_space<smem>>
      %cst_27 = arith.constant 1.250000e-02 : f32
      %67 = arith.mulf %66, %cst_27 : f32
      %c1_28 = arith.constant 1 : index
      %68 = memref.load %arg6[%c1_28] : memref<2xf32, #tpu.memory_space<smem>>
      %cst_29 = arith.constant 1.000000e-01 : f32
      %69 = arith.mulf %68, %cst_29 : f32
      %cst_30 = arith.constant 5.000000e-01 : f32
      %70 = arith.mulf %cst_30, %67 : f32
      %cst_31 = arith.constant 5.000000e-01 : f32
      %71 = arith.mulf %cst_31, %69 : f32
      %72 = arith.addf %70, %71 : f32
      %c0_32 = arith.constant 0 : index
      %c0_33 = arith.constant 0 : index
      %73 = memref.load %arg5[%c0_32, %c0_33] : memref<1x1xf32, #tpu.memory_space<smem>>
      memref.store %72, %arg5[%c0_32, %c0_33] : memref<1x1xf32, #tpu.memory_space<smem>>
    } else {
    }
    return
  }
  func.func @transform_0(%arg0: i32) -> (i32, i32) {
    %c0_i32 = arith.constant 0 : i32
    %c0_i32_0 = arith.constant 0 : i32
    return %arg0, %c0_i32 : i32, i32
  }
  func.func @transform_1(%arg0: i32) -> (i32, i32) {
    %c0_i32 = arith.constant 0 : i32
    %c0_i32_0 = arith.constant 0 : i32
    return %arg0, %c0_i32 : i32, i32
  }
  func.func @transform_2(%arg0: i32) -> (i32, i32) {
    %c0_i32 = arith.constant 0 : i32
    %c0_i32_0 = arith.constant 0 : i32
    %c0_i32_1 = arith.constant 0 : i32
    return %c0_i32, %c0_i32_0 : i32, i32
  }
  func.func @transform_3(%arg0: i32) -> (i32, i32) {
    %c0_i32 = arith.constant 0 : i32
    %c0_i32_0 = arith.constant 0 : i32
    %c0_i32_1 = arith.constant 0 : i32
    return %c0_i32, %c0_i32_0 : i32, i32
  }
  func.func @transform_4(%arg0: i32) -> (i32, i32) {
    %c0_i32 = arith.constant 0 : i32
    %c0_i32_0 = arith.constant 0 : i32
    %c0_i32_1 = arith.constant 0 : i32
    return %c0_i32, %c0_i32_0 : i32, i32
  }
}

</mosaic_0001>

<llo_original>
// kernel: tpu_custom_call.1
$region0: #{tpu_custom_call.1}
  #allocation0 [shape = 'u32[]', space=smem, size = 0x4, offset = 0x4, fixed_abs, tag = 'smem constant byte address 0x4 - core index']
  #allocation1 [shape = 'u32[72,128]{1,0:T(1,128)}', space=vmem, size = 0x9000, scoped, tag = 'internal scratch']
  #allocation2 [shape = 'f32[2]{0:T(128)}', space=smem, size = 0x200, scoped, tag = 'scratch operand']
  %s0 = inlined_call_operand.vmem [shape: f32[16,8], index: 0, kind: input, shape index: {}]
  %s1 = inlined_call_operand.vmem [shape: f32[16,8], index: 1, kind: input, shape index: {}]
  %s2 = inlined_call_operand.vmem [shape: bf16[8,512], index: 2, kind: input, shape index: {}]
  %s3 = inlined_call_operand.vmem [shape: f32[8,8], index: 3, kind: input, shape index: {}]
  %s4 = inlined_call_operand.hbm [shape: f32[1,1], index: 4, kind: output, shape index: {}]
  %s5 = sld [smem:[#allocation0]]
  $region57: #{tpu_custom_call.1} parent=0
    _
  %s7 = ssub.s32 1, %s5
  %s8 = scalar_select 0, %s7, %s5
  $region1: #{tpu_custom_call.1} parent=0
    #allocation3 [shape = 'u8[512]{0}', space=smem, size = 0x200, scoped, tag = 'output window, operand 0, single buffered']
    #allocation4 [shape = 's32[2]{0}', space=sflag, size = 0x8, scoped, tag = 'scoped memory for tpu_custom_call.1']
    %9 = vsyncpa [#allocation4], 0
    loop: start=0, step=1, limit=4
    $region2: #{tpu_custom_call.1} parent=1 // loop_pre_header
      _
    $region3: #{tpu_custom_call.1} parent=1 // loop_header
      %s11 = sphi 0, %s15
      %p12 = scmp.ge.s32.totalorder %s11, 4
      %s21 = sphi 0, %s23
      %s24 = sphi 0, %s21
      %s25 = sphi 0, %s24
      %s41 = sphi 0, %s25
      %s47 = sphi 0, %s49
      %s50 = sphi 0, %s47
      %s51 = sphi 0, %s50
      %s67 = sphi 0, %s51
      %s71 = sphi 0, %s71
      %s73 = sphi 0, %s71
      %s74 = sphi 0, %s73
      %s88 = sphi 0, %s74
      %s92 = sphi 0, %s92
      %s94 = sphi 0, %s92
      %s95 = sphi 0, %s94
      %s109 = sphi 0, %s95
      %s113 = sphi 0, %s113
      %s115 = sphi 0, %s113
      %s116 = sphi 0, %s115
      %s130 = sphi 0, %s116
    $region4: #{tpu_custom_call.1} parent=1 // loop_header_branch
      %14 = sbr.rel (%p12) target = $region8
    $region5: #{tpu_custom_call.1} parent=1 // loop_body
      %s16 = ssub.s32 %s11, 1
      %s17 = ssub.s32 %s11, 2
      %s18 = sadd.s32 %s11, 1
      %s19 = ssub.s32 %s11, %s18
      %p20 = scmp.eq.s32.totalorder %s19, 0
      %s22 = sadd.s32 %s21, 1
      %s23 = scalar_select %p20, %s21, %s22
      %p26 = pneg %p20
      %p27 = scmp.eq.s32.totalorder %s11, 1
      %p28 = por %p26, %p27
      %p29 = scmp.ne.s32.totalorder %s21, %s24
      %p30 = scmp.eq.s32.totalorder %s11, 0
      %p31 = por %p29, %p30
      %p32 = scmp.ne.s32.totalorder %s21, %s24
      %p33 = scmp.eq.s32.totalorder %s16, 1
      %p34 = por %p32, %p33
      %p35 = scmp.ne.s32.totalorder %s24, %s25
      %p36 = scmp.eq.s32.totalorder %s16, 0
      %p37 = por %p35, %p36
      %p38 = scmp.ne.s32.totalorder %s24, %s25
      %p39 = scmp.eq.s32.totalorder %s17, 1
      %p40 = por %p38, %p39
      %p42 = scmp.ne.s32.totalorder %s25, %s41
      %p43 = scmp.eq.s32.totalorder %s17, 0
      %p44 = por %p42, %p43
      %s45 = ssub.s32 %s11, %s18
      %p46 = scmp.eq.s32.totalorder %s45, 0
      %s48 = sadd.s32 %s47, 1
      %s49 = scalar_select %p46, %s47, %s48
      %p52 = pneg %p46
      %p53 = scmp.eq.s32.totalorder %s11, 1
      %p54 = por %p52, %p53
      %p55 = scmp.ne.s32.totalorder %s47, %s50
      %p56 = scmp.eq.s32.totalorder %s11, 0
      %p57 = por %p55, %p56
      %p58 = scmp.ne.s32.totalorder %s47, %s50
      %p59 = scmp.eq.s32.totalorder %s16, 1
      %p60 = por %p58, %p59
      %p61 = scmp.ne.s32.totalorder %s50, %s51
      %p62 = scmp.eq.s32.totalorder %s16, 0
      %p63 = por %p61, %p62
      %p64 = scmp.ne.s32.totalorder %s50, %s51
      %p65 = scmp.eq.s32.totalorder %s17, 1
      %p66 = por %p64, %p65
      %p68 = scmp.ne.s32.totalorder %s51, %s67
      %p69 = scmp.eq.s32.totalorder %s17, 0
      %p70 = por %p68, %p69
      %s72 = sadd.s32 %s71, 1
      %p75 = scmp.eq.s32.totalorder %s11, 1
      %p76 = scmp.ne.s32.totalorder %s71, %s73
      %p77 = scmp.eq.s32.totalorder %s11, 0
      %p78 = por %p76, %p77
      %p79 = scmp.ne.s32.totalorder %s71, %s73
      %p80 = scmp.eq.s32.totalorder %s16, 1
      %p81 = por %p79, %p80
      %p82 = scmp.ne.s32.totalorder %s73, %s74
      %p83 = scmp.eq.s32.totalorder %s16, 0
      %p84 = por %p82, %p83
      %p85 = scmp.ne.s32.totalorder %s73, %s74
      %p86 = scmp.eq.s32.totalorder %s17, 1
      %p87 = por %p85, %p86
      %p89 = scmp.ne.s32.totalorder %s74, %s88
      %p90 = scmp.eq.s32.totalorder %s17, 0
      %p91 = por %p89, %p90
      %s93 = sadd.s32 %s92, 1
      %p96 = scmp.eq.s32.totalorder %s11, 1
      %p97 = scmp.ne.s32.totalorder %s92, %s94
      %p98 = scmp.eq.s32.totalorder %s11, 0
      %p99 = por %p97, %p98
      %p100 = scmp.ne.s32.totalorder %s92, %s94
      %p101 = scmp.eq.s32.totalorder %s16, 1
      %p102 = por %p100, %p101
      %p103 = scmp.ne.s32.totalorder %s94, %s95
      %p104 = scmp.eq.s32.totalorder %s16, 0
      %p105 = por %p103, %p104
      %p106 = scmp.ne.s32.totalorder %s94, %s95
      %p107 = scmp.eq.s32.totalorder %s17, 1
      %p108 = por %p106, %p107
      %p110 = scmp.ne.s32.totalorder %s95, %s109
      %p111 = scmp.eq.s32.totalorder %s17, 0
      %p112 = por %p110, %p111
      %s114 = sadd.s32 %s113, 1
      %p117 = scmp.eq.s32.totalorder %s11, 1
      %p118 = scmp.ne.s32.totalorder %s113, %s115
      %p119 = scmp.eq.s32.totalorder %s11, 0
      %p120 = por %p118, %p119
      %p121 = scmp.ne.s32.totalorder %s113, %s115
      %p122 = scmp.eq.s32.totalorder %s16, 1
      %p123 = por %p121, %p122
      %p124 = scmp.ne.s32.totalorder %s115, %s116
      %p125 = scmp.eq.s32.totalorder %s16, 0
      %p126 = por %p124, %p125
      %p127 = scmp.ne.s32.totalorder %s115, %s116
      %p128 = scmp.eq.s32.totalorder %s17, 1
      %p129 = por %p127, %p128
      %p131 = scmp.ne.s32.totalorder %s116, %s130
      %p132 = scmp.eq.s32.totalorder %s17, 0
      %p133 = por %p131, %p132
      %p134 = scmp.le.s32.totalorder 1, %s11
      %p135 = scmp.lt.s32.totalorder %s11, 3
      %p136 = pnand %p134, %p135
      %p137 = pneg %p136
      // Predicated region
      $region9: #{tpu_custom_call.1} parent=5 // pred_check
        _
      $region10: #{tpu_custom_call.1} parent=5 // pred_check_branch
        %139 = sbr.rel (%p136) target = $region12
      $region11: #{tpu_custom_call.1} parent=5 // pred_region
        %s140 = ssub.s32 %s11, 1
        // Predicated region
        $region13: #{tpu_custom_call.1} parent=11 // pred_check
          %p141 = pneg %p84
        $region14: #{tpu_custom_call.1} parent=11 // pred_check_branch
          %143 = sbr.rel (%p141) target = $region16
        $region15: #{tpu_custom_call.1} parent=11 // pred_region
          _
        $region16: #{tpu_custom_call.1} parent=11 // pred_fallthru
          _
        // Predicated region
        $region17: #{tpu_custom_call.1} parent=11 // pred_check
          %p144 = pneg %p105
        $region18: #{tpu_custom_call.1} parent=11 // pred_check_branch
          %146 = sbr.rel (%p144) target = $region20
        $region19: #{tpu_custom_call.1} parent=11 // pred_region
          _
        $region20: #{tpu_custom_call.1} parent=11 // pred_fallthru
          _
      $region12: #{tpu_custom_call.1} parent=5 // pred_fallthru
        _
      %p147 = scmp.lt.s32.totalorder %s11, 2
      // Predicated region
      $region21: #{tpu_custom_call.1} parent=5 // pred_check
        %p148 = pneg %p147
      $region22: #{tpu_custom_call.1} parent=5 // pred_check_branch
        %150 = sbr.rel (%p148) target = $region24
      $region23: #{tpu_custom_call.1} parent=5 // pred_region
        // Predicated region
        $region25: #{tpu_custom_call.1} parent=23 // pred_check
          %p151 = pneg %p31
        $region26: #{tpu_custom_call.1} parent=23 // pred_check_branch
          %153 = sbr.rel (%p151) target = $region28
        $region27: #{tpu_custom_call.1} parent=23 // pred_region
          %p154 = scmp.lt.s32.totalorder %s11, 1
          %s155 = scalar_select %p154, %s11, 1
          %s156 = smul.addr %s155, 8
          %s157 = scalar_lea.vmem %s0, %s156
        $region28: #{tpu_custom_call.1} parent=23 // pred_fallthru
          _
        // Predicated region
        $region29: #{tpu_custom_call.1} parent=23 // pred_check
          %p158 = pneg %p57
        $region30: #{tpu_custom_call.1} parent=23 // pred_check_branch
          %160 = sbr.rel (%p158) target = $region32
        $region31: #{tpu_custom_call.1} parent=23 // pred_region
          %p161 = scmp.lt.s32.totalorder %s11, 1
          %s162 = scalar_select %p161, %s11, 1
          %s163 = smul.addr %s162, 8
          %s164 = scalar_lea.vmem %s1, %s163
        $region32: #{tpu_custom_call.1} parent=23 // pred_fallthru
          _
      $region24: #{tpu_custom_call.1} parent=5 // pred_fallthru
        _
      %p165 = scmp.le.s32.totalorder 1, %s11
      %p166 = scmp.lt.s32.totalorder %s11, 3
      %p167 = pnand %p165, %p166
      %p168 = pneg %p167
      // Predicated region
      $region33: #{tpu_custom_call.1} parent=5 // pred_check
        _
      $region34: #{tpu_custom_call.1} parent=5 // pred_check_branch
        %170 = sbr.rel (%p167) target = $region36
      $region35: #{tpu_custom_call.1} parent=5 // pred_region
        %s171 = ssub.s32 %s11, 1
        %p172 = scmp.lt.s32.totalorder %s16, 1
        %s173 = scalar_select %p172, %s16, 1
        %s174 = smul.addr %s173, 8
        %s175 = scalar_lea.vmem %s0, %s174
        %p176 = pneg %p37
        %p177 = pneg %p34
        %p178 = scmp.lt.s32.totalorder %s16, 1
        %s179 = scalar_select %p178, %s16, 1
        %s180 = smul.addr %s179, 8
        %s181 = scalar_lea.vmem %s1, %s180
        %p182 = pneg %p63
        %p183 = pneg %p60
        %p184 = pneg %p84
        %p185 = pneg %p81
        %p186 = pneg %p105
        %p187 = pneg %p102
        %p188 = pneg %p126
        %p189 = pneg %p123
        %p190 = scmp.lt.s32.totalorder %s16, 1
        %s191 = scalar_select %p190, %s16, 1
        %s192 = smul.addr %s191, 8
        %s193 = scalar_lea.vmem %s0, %s192
        %p194 = scmp.lt.s32.totalorder %s16, 1
        %s195 = scalar_select %p194, %s16, 1
        %s196 = smul.addr %s195, 8
        %s197 = scalar_lea.vmem %s1, %s196
        %p199 = scmp.eq.s32.totalorder %s16, 0
        // Predicated region
        $region37: #{tpu_custom_call.1} parent=35 // pred_check
          %p200 = pneg %p199
        $region38: #{tpu_custom_call.1} parent=35 // pred_check_branch
          %202 = sbr.rel (%p200) target = $region40
        $region39: #{tpu_custom_call.1} parent=35 // pred_region
          %s203 = scalar_lea.smem [#allocation2], 0
          %204 = sst [smem:[%s203]] 0.0
          %s205 = scalar_lea.smem [#allocation2], 1
          %206 = sst [smem:[%s205]] 0.0
        $region40: #{tpu_custom_call.1} parent=35 // pred_fallthru
          _
        %v207 = vld [vmem:[%s193] sm:$0xff]
        %v208 = vld [vmem:[%s197] sm:$0xff]
        %v209 = vsub.f32 %v207, %v208
        %v210 = vmul.f32 %v209, %v209
        %vm211 = vcmask 64512
        %v212 = vsel %vm211, %v210, 0.0
        %213 = vadd.xlane.f32.xlu0 %v212
        %v214 = vpop.xlane.xlu0 %213
        %v215 = vrot.slane %v214, 4
        %v216 = vadd.f32 %v214, %v215
        %v217 = vrot.slane %v216, 2
        %v218 = vadd.f32 %v216, %v217
        %v219 = vrot.slane %v218, 1
        %v220 = vadd.f32 %v218, %v219
        %s221 = vtos %v220
        %v222 = vpack.c.bf16 %v209, %v209
        %v223 = vld [vmem:[%s2] sm:$0xff]
        %v224 = vld [vmem:[%s2 + $0x8] sm:$0xff]
        %v227 = vunpack.c.l.b16 %v223
        %v228 = vunpack.c.h.b16 %v223
        %v229 = vunpack.c.l.b16 %v224
        %v230 = vunpack.c.h.b16 %v224
        %v231 = vpack.c.b16 %v227, %v227
        %v232 = vpack.c.b16 %v228, %v228
        %v233 = vpack.c.b16 %v229, %v229
        %v234 = vpack.c.b16 %v230, %v230
        %v236 = vsel %vm211, %v222, 0
        %vm238 = vcmask 1043456
        %v240 = vsel %vm238, %v231, 0
        %v243 = vsel %vm238, %v232, 0
        %v246 = vsel %vm238, %v233, 0
        %v249 = vsel %vm238, %v234, 0
        %251 = vmatpush.bf16.msra.mxu0 0
        %252 = vmatpush.bf16.msra.mxu0 0
        %253 = vmatpush.bf16.msra.mxu0 0
        %254 = vmatpush.bf16.msra.mxu0 0
        %255 = vmatpush.bf16.msra.mxu0 0
        %256 = vmatpush.bf16.msra.mxu0 0
        %257 = vmatpush.bf16.msra.mxu0 0
        %258 = vmatpush.bf16.msra.mxu0 %v240
        %259 = vmatmul.bf16.gmra.mxu0 %v236
        %v260 = vpop.f32.mrf.mxu0
        %v261 = vadd.f32 0.0, %v260
        %v262 = vpop.f32.mrf.mxu0
        %263 = vdwg.mxu0
        %264 = vmatpush.bf16.msra.mxu0 0
        %265 = vmatpush.bf16.msra.mxu0 0
        %266 = vmatpush.bf16.msra.mxu0 0
        %267 = vmatpush.bf16.msra.mxu0 0
        %268 = vmatpush.bf16.msra.mxu0 0
        %269 = vmatpush.bf16.msra.mxu0 0
        %270 = vmatpush.bf16.msra.mxu0 0
        %271 = vmatpush.bf16.msra.mxu0 %v243
        %272 = vmatmul.bf16.gmra.mxu0 %v236
        %v273 = vpop.f32.mrf.mxu0
        %v274 = vadd.f32 0.0, %v273
        %v275 = vpop.f32.mrf.mxu0
        %276 = vdwg.mxu0
        %277 = vmatpush.bf16.msra.mxu0 0
        %278 = vmatpush.bf16.msra.mxu0 0
        %279 = vmatpush.bf16.msra.mxu0 0
        %280 = vmatpush.bf16.msra.mxu0 0
        %281 = vmatpush.bf16.msra.mxu0 0
        %282 = vmatpush.bf16.msra.mxu0 0
        %283 = vmatpush.bf16.msra.mxu0 0
        %284 = vmatpush.bf16.msra.mxu0 %v246
        %285 = vmatmul.bf16.gmra.mxu0 %v236
        %v286 = vpop.f32.mrf.mxu0
        %v287 = vadd.f32 0.0, %v286
        %v288 = vpop.f32.mrf.mxu0
        %289 = vdwg.mxu0
        %290 = vmatpush.bf16.msra.mxu0 0
        %291 = vmatpush.bf16.msra.mxu0 0
        %292 = vmatpush.bf16.msra.mxu0 0
        %293 = vmatpush.bf16.msra.mxu0 0
        %294 = vmatpush.bf16.msra.mxu0 0
        %295 = vmatpush.bf16.msra.mxu0 0
        %296 = vmatpush.bf16.msra.mxu0 0
        %297 = vmatpush.bf16.msra.mxu0 %v249
        %298 = vmatmul.bf16.gmra.mxu0 %v236
        %v299 = vpop.f32.mrf.mxu0
        %v300 = vadd.f32 0.0, %v299
        %v301 = vpop.f32.mrf.mxu0
        %302 = vdwg.mxu0
        %v303 = vand.u32 2147483647, %v261
        %v304 = vand.u32 2147483647, %v274
        %v305 = vand.u32 2147483647, %v287
        %v306 = vand.u32 2147483647, %v300
        %v307 = vadd.f32 %v303, %v304
        %v308 = vadd.f32 %v307, %v305
        %v309 = vadd.f32 %v308, %v306
        %310 = vadd.xlane.f32.xlu0 %v309
        %v311 = vpop.xlane.xlu0 %310
        %v312 = vmul.f32 %v311, 0.001953125
        %v313 = vld [vmem:[%s3] sm:$0xff]
        %v315 = vsel %vm211, %v207, 0
        %317 = vmatpush.msra.mxu0 0.0
        %318 = vmatpush.msra.mxu0 0.0
        %319 = vmatpush.msra.mxu0 0.0
        %320 = vmatpush.msra.mxu0 0.0
        %321 = vmatpush.msra.mxu0 0.0
        %322 = vmatpush.msra.mxu0 0.0
        %323 = vmatpush.msra.mxu0 0.0
        %324 = vmatpush.msra.mxu0 0.0
        %325 = vmatpush.msra.mxu0 0.0
        %326 = vmatpush.msra.mxu0 0.0
        %327 = vmatpush.msra.mxu0 0.0
        %328 = vmatpush.msra.mxu0 0.0
        %329 = vmatpush.msra.mxu0 0.0
        %330 = vmatpush.msra.mxu0 0.0
        %331 = vmatpush.msra.mxu0 0.0
        %332 = vmatpush.msra.mxu0 %v313
        %333 = vmatmul.f32.gmra.mxu0 %v315
        %v334 = vpop.f32.mrf.mxu0
        %v335 = vadd.f32 0.0, %v334
        %336 = vdwg.mxu0
        %v338 = vsel %vm211, %v208, 0
        %340 = vmatpush.msra.mxu0 0.0
        %341 = vmatpush.msra.mxu0 0.0
        %342 = vmatpush.msra.mxu0 0.0
        %343 = vmatpush.msra.mxu0 0.0
        %344 = vmatpush.msra.mxu0 0.0
        %345 = vmatpush.msra.mxu0 0.0
        %346 = vmatpush.msra.mxu0 0.0
        %347 = vmatpush.msra.mxu0 0.0
        %348 = vmatpush.msra.mxu0 0.0
        %349 = vmatpush.msra.mxu0 0.0
        %350 = vmatpush.msra.mxu0 0.0
        %351 = vmatpush.msra.mxu0 0.0
        %352 = vmatpush.msra.mxu0 0.0
        %353 = vmatpush.msra.mxu0 0.0
        %354 = vmatpush.msra.mxu0 0.0
        %355 = vmatpush.msra.mxu0 %v313
        %356 = vmatmul.f32.gmra.mxu0 %v338
        %v357 = vpop.f32.mrf.mxu0
        %v358 = vadd.f32 0.0, %v357
        %359 = vdwg.mxu0
        %v360 = vmul.f32 %v335, %v208
        %v361 = vsel %vm211, %v360, 0.0
        %362 = vadd.xlane.f32.xlu0 %v361
        %v363 = vpop.xlane.xlu0 %362
        %v364 = vmul.f32 %v335, %v207
        %v365 = vsel %vm211, %v364, 0.0
        %366 = vadd.xlane.f32.xlu0 %v365
        %v367 = vpop.xlane.xlu0 %366
        %v368 = vmax.f32 %v367, 0.0
        %v369 = vmul.f32 %v358, %v208
        %v370 = vsel %vm211, %v369, 0.0
        %371 = vadd.xlane.f32.xlu0 %v370
        %v372 = vpop.xlane.xlu0 %371
        %v373 = vmax.f32 %v372, 0.0
        %v374 = vrsqrt.pop %v368
        %v375 = vmul.f32 %v374, %v368
        %v376 = vmul.f32 %v375, %v374
        %v377 = vmul.f32 0.5, %v376
        %v378 = vsub.f32 1.5, %v377
        %v379 = vmul.f32 %v374, %v378
        %v380 = vmul.f32 %v368, %v379
        %vm381 = vcmp.eq.f32.partialorder %v368, inf
        %v382 = vsel %vm381, %v368, %v380
        %vm383 = vcmp.eq.f32.partialorder %v368, 0.0
        %v384 = vand.u32 %v368, 2147483648
        %v385 = vsel %vm383, %v384, %v382
        %v386 = vrsqrt.pop %v373
        %v387 = vmul.f32 %v386, %v373
        %v388 = vmul.f32 %v387, %v386
        %v389 = vmul.f32 0.5, %v388
        %v390 = vsub.f32 1.5, %v389
        %v391 = vmul.f32 %v386, %v390
        %v392 = vmul.f32 %v373, %v391
        %vm393 = vcmp.eq.f32.partialorder %v373, inf
        %v394 = vsel %vm393, %v373, %v392
        %vm395 = vcmp.eq.f32.partialorder %v373, 0.0
        %v396 = vand.u32 %v373, 2147483648
        %v397 = vsel %vm395, %v396, %v394
        %v398 = vmul.f32 %v385, %v397
        %v399 = vmax.f32 %v398, 1e-08
        %v400 = vrcp.pop %v399
        %v401 = vmul.f32 %v399, %v400
        %v402 = vsub.f32 1.0, %v401
        %v403 = vmul.f32 %v400, %v402
        %v404 = vadd.f32 %v400, %v403
        %vm405 = vweird.f32 %v399
        %vm406 = vweird.f32 %v400
        %vm407 = vmor %vm405, %vm406
        %v408 = vsel %vm407, %v400, %v404
        %v409 = vand.u32 2147483647, %v399
        %vm410 = vcmp.eq.f32.partialorder %v409, 8.507059e+37
        %v411 = vand.u32 %v399, 2147483648
        %v412 = vor.u32 1.1754944e-38, %v411
        %v413 = vsel %vm410, %v412, %v408
        %v414 = vmul.f32 %v363, %v413
        %v415 = vsub.f32 1.0, %v414
        %v416 = vadd.f32 %v312, %v415
        %s417 = smul.u32 %s16, 8
        %v418 = vlaneseq
        %v419 = vshrl.u32 %v418, 7
        %v420 = vstv %s417
        %v421 = vadd.s32 %v420, %v419
        %vm422 = vcmp.lt.s32.totalorder %v421, 10
        %v423 = vsel %vm422, %v416, 0.0
        %vm424 = vcmask 7168
        %v425 = vsel %vm424, %v423, 0.0
        %426 = vadd.xlane.f32.xlu0 %v425
        %v427 = vpop.xlane.xlu0 %426
        %v428 = vrot.slane %v427, 4
        %v429 = vadd.f32 %v427, %v428
        %v430 = vrot.slane %v429, 2
        %v431 = vadd.f32 %v429, %v430
        %v432 = vrot.slane %v431, 1
        %v433 = vadd.f32 %v431, %v432
        %s434 = vtos %v433
        %s435 = sld [smem:[#allocation2]]
        %s436 = sadd.f32 %s435, %s221
        %s437 = scalar_lea.smem [#allocation2], 0
        %438 = sst [smem:[%s437]] %s436
        %s439 = sld [smem:[#allocation2 + $0x1]]
        %s440 = sadd.f32 %s439, %s434
        %s441 = scalar_lea.smem [#allocation2], 1
        %442 = sst [smem:[%s441]] %s440
        %p443 = scmp.eq.s32.totalorder %s16, 1
        // Predicated region
        $region41: #{tpu_custom_call.1} parent=35 // pred_check
          %p444 = pneg %p443
        $region42: #{tpu_custom_call.1} parent=35 // pred_check_branch
          %446 = sbr.rel (%p444) target = $region44
        $region43: #{tpu_custom_call.1} parent=35 // pred_region
          %s447 = sld [smem:[#allocation2]]
          %s448 = smul.f32 %s447, 0.0125
          %s449 = sld [smem:[#allocation2 + $0x1]]
          %s450 = smul.f32 %s449, 0.1
          %s451 = smul.f32 %s448, 0.5
          %s452 = smul.f32 %s450, 0.5
          %s453 = sadd.f32 %s451, %s452
          %s454 = scalar_lea.smem [#allocation3], 0
          %455 = sst [smem:[%s454]] %s453
        $region44: #{tpu_custom_call.1} parent=35 // pred_fallthru
          _
        // Predicated region
        $region45: #{tpu_custom_call.1} parent=35 // pred_check
          %p456 = pneg %p123
        $region46: #{tpu_custom_call.1} parent=35 // pred_check_branch
          %458 = sbr.rel (%p456) target = $region48
        $region47: #{tpu_custom_call.1} parent=35 // pred_region
          %460 = vsyncadd [#allocation4], 0
          %s462 = sshll.u32 %s4, 4
          %s463 = int_to_ptr.hbm [resolvable:$true] %s462
          %465 = dma.smem_to_hbm [#allocation3], 16, %s463, [#allocation4]
        $region48: #{tpu_custom_call.1} parent=35 // pred_fallthru
          _
        // Predicated region
        $region49: #{tpu_custom_call.1} parent=35 // pred_check
          %p466 = pneg %p123
        $region50: #{tpu_custom_call.1} parent=35 // pred_check_branch
          %468 = sbr.rel (%p466) target = $region52
        $region51: #{tpu_custom_call.1} parent=35 // pred_region
          %470 = dma.done [#allocation4], 16
        $region52: #{tpu_custom_call.1} parent=35 // pred_fallthru
          _
        %471 = sfence
      $region36: #{tpu_custom_call.1} parent=5 // pred_fallthru
        _
      %p472 = scmp.le.s32.totalorder 2, %s11
      // Predicated region
      $region53: #{tpu_custom_call.1} parent=5 // pred_check
        %p473 = pneg %p472
      $region54: #{tpu_custom_call.1} parent=5 // pred_check_branch
        %475 = sbr.rel (%p473) target = $region56
      $region55: #{tpu_custom_call.1} parent=5 // pred_region
        %s476 = ssub.s32 %s11, 2
      $region56: #{tpu_custom_call.1} parent=5 // pred_fallthru
        _
    $region6: #{tpu_custom_call.1} parent=1 // loop_footer
      %s15 = sadd.s32 1, %s11
    $region7: #{tpu_custom_call.1} parent=1 // loop_footer_branch
      %10 = sbr.rel target = $region3
    $region8: #{tpu_custom_call.1} parent=1 // loop_exit
      _
    %477 = vsyncpa [#allocation4], 1
    %s478 = scalar_lea.sflag [#allocation4], 1
    %479 = vsyncpa %s478, 1

</llo_original>
